<compile_context>
chip_gen: v7x
topology: tpu7x:2x2x1
jax: 0.10.0
libtpu: 0.0.40
codegen_flags: <defaults>
</compile_context>

<pallas_src>
import numpy as np
import jax
import jax.numpy as jnp
from jax import lax
from jax.experimental import pallas as pl
from jax.experimental.pallas import tpu as pltpu

HIDDEN = 48        # logical GRU hidden size (matches Hx: [1, Na, 48])
HIDDEN_PAD = 128   # lane-padded hidden size used inside the decoder kernel
C1 = 16            # intermediate CNN channels
CE = 32            # scene encoding channels

_VMEM_LIMIT = 32 * 1024 * 1024   # explicit scoped-VMEM budget (safe on v5e/v6e/v7x)


def _round_up(x, m):
    return ((x + m - 1) // m) * m


# ---------------------------------------------------------------------------
# Pallas kernel 1: transposed conv-as-matmul.
#   out[b] = relu(W^T [Cout,K] @ X^T[b] [K, tm] + bias) -> [Cout, tm]
#   tm (spatial) on lanes => lane-dense, unmasked stores; Cout (16/32) on
#   sublanes (multiples of 8).  grid = (Nb, M_tiles), both "parallel".
# ---------------------------------------------------------------------------
def _convT_kernel(xT_ref, wT_ref, b_ref, o_ref):
    acc = jnp.dot(wT_ref[...], xT_ref[0], preferred_element_type=jnp.float32)
    o_ref[0] = jnp.maximum(acc + b_ref[...], 0.0)


def conv_matmulT(xT, wT, b, tile_m=2048):
    """xT: [Nb, K, M], wT: [Cout, K], b: [Cout] -> [Nb, Cout, M] (ReLU)."""
    Nb, K, M = xT.shape
    Cout = wT.shape[0]
    tm = min(tile_m, _round_up(M, 128))
    Mp = _round_up(M, tm)
    if Mp != M:
        xT = jnp.pad(xT, ((0, 0), (0, 0), (0, Mp - M)))
    out = pl.pallas_call(
        _convT_kernel,
        out_shape=jax.ShapeDtypeStruct((Nb, Cout, Mp), jnp.float32),
        grid=(Nb, Mp // tm),
        in_specs=[
            pl.BlockSpec((1, K, tm), lambda nb, m: (nb, 0, m)),
            pl.BlockSpec((Cout, K), lambda nb, m: (0, 0)),
            pl.BlockSpec((Cout, 1), lambda nb, m: (0, 0)),
        ],
        out_specs=pl.BlockSpec((1, Cout, tm), lambda nb, m: (nb, 0, m)),
        compiler_params=pltpu.CompilerParams(
            dimension_semantics=("parallel", "parallel"),
            vmem_limit_bytes=_VMEM_LIMIT),
    )(xT.astype(jnp.float32), wT.astype(jnp.float32),
      b.reshape(Cout, 1).astype(jnp.float32))
    return out[:, :, :M] if Mp != M else out


def _im2colT(x_nchw, k, stride, pad):
    """Channel-first patch extraction (XLA glue): [Nb,C,H,W] -> [Nb, k*k*C, Ho*Wo].

    Rows are ordered (ky, kx, c) to match the weight row layout.
    TODO(synk): this still materializes a k*k-expanded patch matrix in HBM;
                a fused in-kernel formulation would cut that traffic ~9x.
    """
    xp = jnp.pad(x_nchw, ((0, 0), (0, 0), (pad, pad), (pad, pad)))
    Nb, C, Hp, Wp = xp.shape
    Ho = (Hp - k) // stride + 1
    Wo = (Wp - k) // stride + 1
    rows = []
    for ky in range(k):
        for kx in range(k):
            rows.append(
                xp[:, :, ky:ky + stride * Ho:stride, kx:kx + stride * Wo:stride]
                .reshape(Nb, C, Ho * Wo))
    return jnp.concatenate(rows, axis=1), (Ho, Wo)


def scene_cnn(scene_nchw, params):
    """Scene extraction: Conv(3->16,k3,s1,p1)+ReLU, Conv(16->32,k3,s2,p1)+ReLU.

    Stays channel-first throughout; the result is already NCHW (the required
    `scene_feature` layout), so no HBM transposes are needed.
    """
    x = scene_nchw.astype(jnp.float32)
    nb = x.shape[0]
    p1, (h1, w1) = _im2colT(x, 3, 1, 1)
    y1 = conv_matmulT(p1, jnp.transpose(params["w1"]), params["b1"])
    y1 = y1.reshape(nb, C1, h1, w1)
    p2, (h2, w2) = _im2colT(y1, 3, 2, 1)
    y2 = conv_matmulT(p2, jnp.transpose(params["w2"]), params["b2"])
    return y2.reshape(nb, CE, h2, w2)      # [Nb, Ce, H/2, W/2]  (NCHW)


# ---------------------------------------------------------------------------
# Pallas kernel 2: IOC decoder.
#   grid = (agent_tiles,)  ("parallel"; TN capped at 128 for megacore).
#   The full Td recurrence runs as an in-kernel fori_loop: one DMA of the
#   (Td, TN, 2+Ce) input and one lane-dense (Td, 3, TN) output block per tile.
#   The six 48x48 gate matmuls are fused into two (128, 384) bf16 matmuls with
#   each gate in its own 128-lane slot (padded lanes stay exactly 0); the
#   score/delta heads are fused into one transposed (3, 128) matmul so each
#   per-step store is a lane-dense (3, TN) slab.
# ---------------------------------------------------------------------------
def _ioc_decode_kernel(inp_ref, h0_ref,
                       w_emb_ref, b_emb_ref,
                       w_ih_ref, w_hh_ref, b_ih_ref, b_hh_ref,
                       w_headT_ref, b_head_ref,
                       out_ref):
    hp = HIDDEN_PAD
    td = inp_ref.shape[0]

    def step(t, h):
        x = inp_ref[t]                                     # [TN, 2+Ce] f32

        # fused [velocity | pooled-feature] embedding, bf16 MXU / f32 accum.
        e = jnp.dot(x.astype(jnp.bfloat16), w_emb_ref[...],
                    preferred_element_type=jnp.float32) + b_emb_ref[...]
        e = jnp.maximum(e, 0.0)                            # [TN, HP], pad lanes = 0

        gi = jnp.dot(e.astype(jnp.bfloat16), w_ih_ref[...],
                     preferred_element_type=jnp.float32) + b_ih_ref[...]
        gh = jnp.dot(h.astype(jnp.bfloat16), w_hh_ref[...],
                     preferred_element_type=jnp.float32) + b_hh_ref[...]

        # PyTorch GRUCell semantics (gate order r, z, n); slices are 128-aligned.
        r = jax.nn.sigmoid(gi[:, 0:hp] + gh[:, 0:hp])
        z = jax.nn.sigmoid(gi[:, hp:2 * hp] + gh[:, hp:2 * hp])
        n = jnp.tanh(gi[:, 2 * hp:3 * hp] + r * gh[:, 2 * hp:3 * hp])
        h_new = (1.0 - z) * n + z * h

        # fused score/delta head, computed transposed -> (3, TN) lane-dense.
        head = lax.dot_general(w_headT_ref[...], h_new,
                               dimension_numbers=(((1,), (1,)), ((), ())),
                               preferred_element_type=jnp.float32)
        out_ref[t] = head + b_head_ref[...]
        return h_new

    lax.fori_loop(0, td, step, h0_ref[...])


def ioc_decode(inp, h0, packed):
    """inp: [Td, N, 2+Ce], h0: [N, HIDDEN] -> scores [Td,N,1], y_delta [Td,N,2]."""
    Td, N, Cin = inp.shape
    HP = HIDDEN_PAD

    # Agent tile: multiple of 8, capped at 128 so the parallel axis can span
    # both v7x TensorCores once Np >= 256.
    TN = min(128, _round_up(N, 8))
    Np = _round_up(N, TN)
    NT = Np // TN
    if Np != N:
        inp = jnp.pad(inp, ((0, 0), (0, Np - N), (0, 0)))
        h0 = jnp.pad(h0, ((0, Np - N), (0, 0)))
    # Pad hidden dim to 128 lanes (padded lanes provably stay 0 in the kernel).
    h0 = jnp.pad(h0, ((0, 0), (0, HP - h0.shape[-1])))

    out = pl.pallas_call(
        _ioc_decode_kernel,
        out_shape=jax.ShapeDtypeStruct((Td, 3, Np), jnp.float32),
        grid=(NT,),
        in_specs=[
            pl.BlockSpec((Td, TN, Cin), lambda a: (0, a, 0)),   # [vel|feat] sweep
            pl.BlockSpec((TN, HP), lambda a: (a, 0)),           # h0 tile
            pl.BlockSpec((Cin, HP), lambda a: (0, 0)),          # W_emb (bf16)
            pl.BlockSpec((1, HP), lambda a: (0, 0)),            # b_emb
            pl.BlockSpec((HP, 3 * HP), lambda a: (0, 0)),       # W_ih (r|z|n, bf16)
            pl.BlockSpec((HP, 3 * HP), lambda a: (0, 0)),       # W_hh (r|z|n, bf16)
            pl.BlockSpec((1, 3 * HP), lambda a: (0, 0)),        # b_ih
            pl.BlockSpec((1, 3 * HP), lambda a: (0, 0)),        # b_hh
            pl.BlockSpec((3, HP), lambda a: (0, 0)),            # W_head^T
            pl.BlockSpec((3, 1), lambda a: (0, 0)),             # b_head
        ],
        out_specs=pl.BlockSpec((Td, 3, TN), lambda a: (0, 0, a)),
        compiler_params=pltpu.CompilerParams(
            dimension_semantics=("parallel",),
            vmem_limit_bytes=_VMEM_LIMIT),
    )(inp, h0,
      packed["w_emb"], packed["b_emb"],
      packed["w_ih"], packed["w_hh"], packed["b_ih"], packed["b_hh"],
      packed["w_headT"], packed["b_head"])

    scores = out[:, 0, :N].reshape(Td, N, 1)
    y_delta = jnp.transpose(out[:, 1:3, :N], (0, 2, 1))
    return scores, y_delta


# ---------------------------------------------------------------------------
# Glue: bilinear pooling of scene features at agent positions.
# TODO(synk): data-dependent gather (grid_sample-style pooling) has no clean
#             BlockSpec equivalent; done in plain JAX.  Positions are treated
#             as pixel coordinates (x, y) on the half-resolution feature map
#             (no /2 rescaling or [-1,1] normalization applied).
# ---------------------------------------------------------------------------
def pool_scene_features(feat_nchw, position, ep_index):
    Nb, Ce, Hf, Wf = feat_nchw.shape
    Td, Na, Nc, _ = position.shape
    pos = position.reshape(Td, Na * Nc, 2)
    ep = jnp.repeat(jnp.asarray(ep_index, jnp.int32), Nc)     # [Na*Nc]
    feat_flat = jnp.transpose(feat_nchw, (0, 2, 3, 1)).reshape(Nb * Hf * Wf, Ce)

    x = jnp.clip(pos[..., 0], 0.0, Wf - 1.0)
    y = jnp.clip(pos[..., 1], 0.0, Hf - 1.0)
    x0 = jnp.floor(x)
    y0 = jnp.floor(y)
    x1 = jnp.minimum(x0 + 1.0, Wf - 1.0)
    y1 = jnp.minimum(y0 + 1.0, Hf - 1.0)
    wx = x - x0
    wy = y - y0
    base = ep[None, :] * (Hf * Wf)

    def gather(yy, xx):
        idx = base + yy.astype(jnp.int32) * Wf + xx.astype(jnp.int32)
        return feat_flat[idx]                                  # [Td, Na*Nc, Ce]

    f00 = gather(y0, x0)
    f01 = gather(y0, x1)
    f10 = gather(y1, x0)
    f11 = gather(y1, x1)
    w00 = ((1 - wy) * (1 - wx))[..., None]
    w01 = ((1 - wy) * wx)[..., None]
    w10 = (wy * (1 - wx))[..., None]
    w11 = (wy * wx)[..., None]
    return f00 * w00 + f01 * w01 + f10 * w10 + f11 * w11       # [Td, Na*Nc, Ce]


# ---------------------------------------------------------------------------
# Parameter init (deterministic, synthetic, logical PyTorch-like shapes) and
# packing into the fused / lane-padded / bf16 decoder layout.
# ---------------------------------------------------------------------------
def init_params(key, in_channels=3):
    ks = jax.random.split(key, 10)

    def rnd(k, shape, scale=0.1):
        return (scale * jax.random.normal(k, shape)).astype(jnp.float32)

    return {
        "w1": rnd(ks[0], (3 * 3 * in_channels, C1)),   # rows ordered (ky, kx, cin)
        "b1": jnp.zeros((C1,), jnp.float32),
        "w2": rnd(ks[1], (3 * 3 * C1, CE)),
        "b2": jnp.zeros((CE,), jnp.float32),
        "w_emb_v": rnd(ks[2], (2, HIDDEN)),
        "w_emb_f": rnd(ks[3], (CE, HIDDEN)),
        "b_emb": jnp.zeros((1, HIDDEN), jnp.float32),
        "w_ih": rnd(ks[4], (3, HIDDEN, HIDDEN)),
        "w_hh": rnd(ks[5], (3, HIDDEN, HIDDEN)),
        "b_ih": rnd(ks[6], (3, 1, HIDDEN)),
        "b_hh": rnd(ks[7], (3, 1, HIDDEN)),
        "w_score": rnd(ks[8], (HIDDEN, 1)),
        "b_score": jnp.zeros((1, 1), jnp.float32),
        "w_delta": rnd(ks[9], (HIDDEN, 2)),
        "b_delta": jnp.zeros((1, 2), jnp.float32),
    }


def pack_decoder_params(p):
    """Fuse + lane-pad + bf16-cast the GRU / head params for the decoder kernel.

    Invariant: all padded weight columns / bias lanes are exactly zero so the
    padded hidden lanes stay 0 for the whole recurrence (tested below by the
    finiteness checks; required if real checkpoints are ever loaded).
    """
    H, HP = HIDDEN, HIDDEN_PAD

    def pad_cols(w):
        return jnp.pad(w.astype(jnp.float32), ((0, 0), (0, HP - w.shape[1])))

    # single fused embedding matmul: rows = [velocity(2) ; pooled feature(Ce)]
    w_emb = jnp.concatenate([p["w_emb_v"], p["w_emb_f"]], axis=0)   # (2+Ce, H)
    w_emb = pad_cols(w_emb).astype(jnp.bfloat16)                    # (2+Ce, HP)
    b_emb = pad_cols(p["b_emb"])                                    # (1, HP) f32

    def pack_gates(w):          # (3, H, H) -> (HP, 3*HP), gate per 128-lane slot
        out = jnp.zeros((HP, 3 * HP), jnp.float32)
        for g in range(3):
            out = out.at[:H, g * HP:g * HP + H].set(w[g])
        return out

    def pack_gate_bias(b):      # (3, 1, H) -> (1, 3*HP)
        out = jnp.zeros((1, 3 * HP), jnp.float32)
        for g in range(3):
            out = out.at[:, g * HP:g * HP + H].set(b[g])
        return out

    # fused score/delta head, transposed so per-step output is (3, TN) lane-dense.
    w_headT = jnp.zeros((3, HP), jnp.float32)
    w_headT = w_headT.at[0:1, :H].set(jnp.transpose(p["w_score"]))
    w_headT = w_headT.at[1:3, :H].set(jnp.transpose(p["w_delta"]))
    b_head = jnp.transpose(
        jnp.concatenate([p["b_score"], p["b_delta"]], axis=1))      # (3, 1)

    return {
        "w_emb": w_emb, "b_emb": b_emb,
        "w_ih": pack_gates(p["w_ih"]).astype(jnp.bfloat16),
        "w_hh": pack_gates(p["w_hh"]).astype(jnp.bfloat16),
        "b_ih": pack_gate_bias(p["b_ih"]),
        "b_hh": pack_gate_bias(p["b_hh"]),
        "w_headT": w_headT, "b_head": b_head,
    }


# ---------------------------------------------------------------------------
# DESIRE_IOC forward.
# ---------------------------------------------------------------------------
def desire_ioc_forward(velocity, position, Hx, scene, num_tgt_trajs, params,
                       scene_encoded=False):
    """
    velocity: [Td, Na, Nc, 2]   position: [Td, Na, Nc, 2]   Hx: [1, Na, 48]
    scene:    [Nb, 3, H, W] (or [Nb, Ce, H/2, W/2] if scene_encoded)
    returns scores [Td,Na,Nc,1], y_delta [Td,Na,Nc,2], scene_feature [Nb,Ce,H/2,W/2]
    """
    velocity = jax.lax.stop_gradient(velocity)   # .detach()
    position = jax.lax.stop_gradient(position)   # .detach()
    Hx = jax.lax.stop_gradient(Hx)               # .detach()

    Td, Na, Nc, _ = velocity.shape
    if scene_encoded:
        feat_nchw = scene.astype(jnp.float32)
    else:
        feat_nchw = scene_cnn(scene, params)     # already NCHW

    ep_index = np.repeat(np.arange(len(num_tgt_trajs)), np.asarray(num_tgt_trajs))
    pooled = pool_scene_features(feat_nchw, position.astype(jnp.float32), ep_index)

    vel_flat = velocity.reshape(Td, Na * Nc, 2).astype(jnp.float32)
    inp = jnp.concatenate([vel_flat, pooled], axis=-1)          # [Td, Na*Nc, 2+Ce]

    h0 = jnp.broadcast_to(Hx[0][:, None, :], (Na, Nc, HIDDEN))
    h0 = h0.reshape(Na * Nc, HIDDEN).astype(jnp.float32)

    packed = pack_decoder_params(params)
    scores, y_delta = ioc_decode(inp, h0, packed)
    scores = scores.reshape(Td, Na, Nc, 1)
    y_delta = y_delta.reshape(Td, Na, Nc, 2)
    return scores, y_delta, feat_nchw


if __name__ == "__main__":
    key = jax.random.PRNGKey(0)
    kp, kv, kpos, kh, ks = jax.random.split(key, 5)

    Td, Nb, Nc, Cin, H, W = 6, 2, 3, 3, 16, 16
    num_tgt_trajs = np.array([2, 2])
    Na = int(num_tgt_trajs.sum())

    params = init_params(kp, in_channels=Cin)
    velocity = jax.random.normal(kv, (Td, Na, Nc, 2), jnp.float32)
    position = jax.random.uniform(kpos, (Td, Na, Nc, 2), jnp.float32,
                                  0.0, float(H // 2 - 1))
    Hx = jax.random.normal(kh, (1, Na, HIDDEN), jnp.float32)
    scene = jax.random.normal(ks, (Nb, Cin, H, W), jnp.float32)

    scores, y_delta, scene_feature = desire_ioc_forward(
        velocity, position, Hx, scene, num_tgt_trajs, params,
        scene_encoded=False)
    jax.block_until_ready((scores, y_delta, scene_feature))

    assert scores.shape == (Td, Na, Nc, 1)
    assert y_delta.shape == (Td, Na, Nc, 2)
    assert scene_feature.shape == (Nb, CE, H // 2, W // 2)
    assert bool(jnp.all(jnp.isfinite(scores)))
    assert bool(jnp.all(jnp.isfinite(y_delta)))
    assert bool(jnp.all(jnp.isfinite(scene_feature)))
    print("KERNEL_OK")
</pallas_src>

<mosaic_0001>
module attributes {stable_mosaic.version = 11 : i64} {
  func.func @_convT_kernel(%arg0: i32, %arg1: i32, %arg2: memref<1x27x256xf32, #tpu.memory_space<vmem>>, %arg3: memref<16x27xf32, #tpu.memory_space<vmem>>, %arg4: memref<16x1xf32, #tpu.memory_space<vmem>>, %arg5: memref<1x16x256xf32, #tpu.memory_space<vmem>>) attributes {dimension_semantics = [#tpu.dimension_semantics<parallel>, #tpu.dimension_semantics<parallel>], iteration_bounds = array<i64: 2, 1>, scalar_prefetch = 0 : i64, scratch_operands = 0 : i64, tpu.core_type = #tpu.core_type<tc>, window_params = [{transform_indices = @transform_0, window_bounds = array<i64: 1, 27, 256>}, {pipeline_mode = #tpu.pipeline_mode<synchronous>, transform_indices = @transform_1, window_bounds = array<i64: 16, 27>}, {pipeline_mode = #tpu.pipeline_mode<synchronous>, transform_indices = @transform_2, window_bounds = array<i64: 16, 1>}, {transform_indices = @transform_3, window_bounds = array<i64: 1, 16, 256>}]} {
    %c0 = arith.constant 0 : index
    %c0_0 = arith.constant 0 : index
    %0 = vector.load %arg3[%c0, %c0_0] : memref<16x27xf32, #tpu.memory_space<vmem>>, vector<16x27xf32>
    %c0_1 = arith.constant 0 : index
    %c0_2 = arith.constant 0 : index
    %c0_3 = arith.constant 0 : index
    %1 = vector.load %arg2[%c0_1, %c0_2, %c0_3] : memref<1x27x256xf32, #tpu.memory_space<vmem>>, vector<1x27x256xf32>
    %2 = vector.shape_cast %1 : vector<1x27x256xf32> to vector<27x256xf32>
    %cst = arith.constant dense<0.000000e+00> : vector<16x256xf32>
    %3 = tpu.matmul %0, %2, %cst {dimension_numbers = #tpu.dot_dimension_numbers<[1], [0], [0], [1], [0, 0, 1, 1], [], []>} : vector<16x27xf32>, vector<27x256xf32>, vector<16x256xf32> -> vector<16x256xf32>
    %c0_4 = arith.constant 0 : index
    %c0_5 = arith.constant 0 : index
    %4 = vector.load %arg4[%c0_4, %c0_5] : memref<16x1xf32, #tpu.memory_space<vmem>>, vector<16x1xf32>
    %5 = vector.broadcast %4 : vector<16x1xf32> to vector<16x256xf32>
    %6 = arith.addf %3, %5 : vector<16x256xf32>
    %cst_6 = arith.constant 0.000000e+00 : f32
    %7 = vector.broadcast %cst_6 : f32 to vector<16x256xf32>
    %8 = arith.maximumf %6, %7 : vector<16x256xf32>
    %c0_7 = arith.constant 0 : index
    %c0_8 = arith.constant 0 : index
    %c0_9 = arith.constant 0 : index
    %9 = vector.load %arg5[%c0_7, %c0_8, %c0_9] : memref<1x16x256xf32, #tpu.memory_space<vmem>>, vector<1x16x256xf32>
    %10 = vector.shape_cast %9 : vector<1x16x256xf32> to vector<16x256xf32>
    %11 = vector.shape_cast %8 : vector<16x256xf32> to vector<1x16x256xf32>
    tpu.vector_store %arg5[%c0_7, %c0_8, %c0_9], %11 {strides = array<i32>} : memref<1x16x256xf32, #tpu.memory_space<vmem>>, vector<1x16x256xf32>,
    return
  }
  func.func @transform_0(%arg0: i32, %arg1: i32) -> (i32, i32, i32) {
    %c0_i32 = arith.constant 0 : i32
    %c0_i32_0 = arith.constant 0 : i32
    return %arg0, %c0_i32, %arg1 : i32, i32, i32
  }
  func.func @transform_1(%arg0: i32, %arg1: i32) -> (i32, i32) {
    %c0_i32 = arith.constant 0 : i32
    %c0_i32_0 = arith.constant 0 : i32
    %c0_i32_1 = arith.constant 0 : i32
    return %c0_i32, %c0_i32_0 : i32, i32
  }
  func.func @transform_2(%arg0: i32, %arg1: i32) -> (i32, i32) {
    %c0_i32 = arith.constant 0 : i32
    %c0_i32_0 = arith.constant 0 : i32
    %c0_i32_1 = arith.constant 0 : i32
    return %c0_i32, %c0_i32_0 : i32, i32
  }
  func.func @transform_3(%arg0: i32, %arg1: i32) -> (i32, i32, i32) {
    %c0_i32 = arith.constant 0 : i32
    %c0_i32_0 = arith.constant 0 : i32
    return %arg0, %c0_i32, %arg1 : i32, i32, i32
  }
}

</mosaic_0001>

<llo_original>
// kernel: tpu_custom_call.1
$region0: #{tpu_custom_call.1}
  #allocation0 [shape = 'u32[]', space=smem, size = 0x4, offset = 0x4, fixed_abs, tag = 'smem constant byte address 0x4 - core index']
  #allocation1 [shape = 'u32[144,128]{1,0:T(1,128)}', space=vmem, size = 0x12000, scoped, tag = 'internal scratch']
  %s0 = inlined_call_operand.vmem [shape: f32[2,27,256], index: 0, kind: input, shape index: {}]
  %s1 = inlined_call_operand.vmem [shape: f32[16,27], index: 1, kind: input, shape index: {}]
  %s2 = inlined_call_operand.vmem [shape: f32[16,1], index: 2, kind: input, shape index: {}]
  %s3 = inlined_call_operand.hbm [shape: f32[2,16,256], index: 3, kind: output, shape index: {}]
  %s4 = sld [smem:[#allocation0]]
  $region45: #{tpu_custom_call.1} parent=0
    _
  %s6 = ssub.s32 1, %s4
  %s7 = scalar_select 0, %s6, %s4
  $region1: #{tpu_custom_call.1} parent=0
    #allocation2 [shape = 'u8[32768]{0}', space=vmem, size = 0x8000, scoped, tag = 'output window, operand 0']
    #allocation3 [shape = 's32[2]{0}', space=sflag, size = 0x8, scoped, tag = 'scoped memory for tpu_custom_call.1']
    %8 = vsyncpa [#allocation3], 0
    %s9 = scalar_lea.sflag [#allocation3], 1
    %10 = vsyncpa %s9, 0
    loop: start=0, step=1, limit=4
    $region2: #{tpu_custom_call.1} parent=1 // loop_pre_header
      _
    $region3: #{tpu_custom_call.1} parent=1 // loop_header
      %s12 = sphi 0, %s16
      %p13 = scmp.ge.s32.totalorder %s12, 4
      %s19 = sphi 0, %s31
      %s20 = sphi 0, %s27
      %s21 = sphi 0, %s19
      %s22 = sphi 0, %s20
      %s23 = sphi 0, %s21
      %s24 = sphi 0, %s22
      %s36 = sphi 0, %s38
      %s39 = sphi 0, %s36
      %s40 = sphi 0, %s39
      %s56 = sphi 0, %s40
      %s60 = sphi 0, %s60
      %s62 = sphi 0, %s60
      %s63 = sphi 0, %s62
      %s77 = sphi 0, %s63
      %s81 = sphi 0, %s81
      %s83 = sphi 0, %s81
      %s84 = sphi 0, %s83
      %s98 = sphi 0, %s84
      %s106 = sphi 0, %s108
      %s109 = sphi 0, %s106
      %s110 = sphi 0, %s109
      %s126 = sphi 0, %s110
    $region4: #{tpu_custom_call.1} parent=1 // loop_header_branch
      %15 = sbr.rel (%p13) target = $region8
    $region5: #{tpu_custom_call.1} parent=1 // loop_body
      %s17 = ssub.s32 %s12, 1
      %s18 = ssub.s32 %s12, 2
      %s25 = sadd.s32 1, %s20
      %p26 = scmp.ge.s32.totalorder %s25, 1
      %s27 = scalar_select %p26, 0, %s25
      %s28 = sadd.s32 1, %s19
      %s29 = scalar_select %p26, %s28, %s19
      %p30 = scmp.ge.s32.totalorder %s29, 2
      %s31 = scalar_select %p30, 0, %s29
      %s32 = ssub.s32 %s19, %s31
      %s33 = ssub.s32 %s20, %s27
      %s34 = sor.u32 %s32, %s33
      %p35 = scmp.eq.s32.totalorder %s34, 0
      %s37 = sadd.s32 %s36, 1
      %s38 = scalar_select %p35, %s36, %s37
      %p41 = pneg %p35
      %p42 = scmp.eq.s32.totalorder %s12, 1
      %p43 = por %p41, %p42
      %p44 = scmp.ne.s32.totalorder %s36, %s39
      %p45 = scmp.eq.s32.totalorder %s12, 0
      %p46 = por %p44, %p45
      %p47 = scmp.ne.s32.totalorder %s36, %s39
      %p48 = scmp.eq.s32.totalorder %s17, 1
      %p49 = por %p47, %p48
      %p50 = scmp.ne.s32.totalorder %s39, %s40
      %p51 = scmp.eq.s32.totalorder %s17, 0
      %p52 = por %p50, %p51
      %p53 = scmp.ne.s32.totalorder %s39, %s40
      %p54 = scmp.eq.s32.totalorder %s18, 1
      %p55 = por %p53, %p54
      %p57 = scmp.ne.s32.totalorder %s40, %s56
      %p58 = scmp.eq.s32.totalorder %s18, 0
      %p59 = por %p57, %p58
      %s61 = sadd.s32 %s60, 1
      %p64 = scmp.eq.s32.totalorder %s12, 1
      %p65 = scmp.ne.s32.totalorder %s60, %s62
      %p66 = scmp.eq.s32.totalorder %s12, 0
      %p67 = por %p65, %p66
      %p68 = scmp.ne.s32.totalorder %s60, %s62
      %p69 = scmp.eq.s32.totalorder %s17, 1
      %p70 = por %p68, %p69
      %p71 = scmp.ne.s32.totalorder %s62, %s63
      %p72 = scmp.eq.s32.totalorder %s17, 0
      %p73 = por %p71, %p72
      %p74 = scmp.ne.s32.totalorder %s62, %s63
      %p75 = scmp.eq.s32.totalorder %s18, 1
      %p76 = por %p74, %p75
      %p78 = scmp.ne.s32.totalorder %s63, %s77
      %p79 = scmp.eq.s32.totalorder %s18, 0
      %p80 = por %p78, %p79
      %s82 = sadd.s32 %s81, 1
      %p85 = scmp.eq.s32.totalorder %s12, 1
      %p86 = scmp.ne.s32.totalorder %s81, %s83
      %p87 = scmp.eq.s32.totalorder %s12, 0
      %p88 = por %p86, %p87
      %p89 = scmp.ne.s32.totalorder %s81, %s83
      %p90 = scmp.eq.s32.totalorder %s17, 1
      %p91 = por %p89, %p90
      %p92 = scmp.ne.s32.totalorder %s83, %s84
      %p93 = scmp.eq.s32.totalorder %s17, 0
      %p94 = por %p92, %p93
      %p95 = scmp.ne.s32.totalorder %s83, %s84
      %p96 = scmp.eq.s32.totalorder %s18, 1
      %p97 = por %p95, %p96
      %p99 = scmp.ne.s32.totalorder %s84, %s98
      %p100 = scmp.eq.s32.totalorder %s18, 0
      %p101 = por %p99, %p100
      %s102 = ssub.s32 %s19, %s31
      %s103 = ssub.s32 %s20, %s27
      %s104 = sor.u32 %s102, %s103
      %p105 = scmp.eq.s32.totalorder %s104, 0
      %s107 = sadd.s32 %s106, 1
      %s108 = scalar_select %p105, %s106, %s107
      %p111 = pneg %p105
      %p112 = scmp.eq.s32.totalorder %s12, 1
      %p113 = por %p111, %p112
      %p114 = scmp.ne.s32.totalorder %s106, %s109
      %p115 = scmp.eq.s32.totalorder %s12, 0
      %p116 = por %p114, %p115
      %p117 = scmp.ne.s32.totalorder %s106, %s109
      %p118 = scmp.eq.s32.totalorder %s17, 1
      %p119 = por %p117, %p118
      %p120 = scmp.ne.s32.totalorder %s109, %s110
      %p121 = scmp.eq.s32.totalorder %s17, 0
      %p122 = por %p120, %p121
      %p123 = scmp.ne.s32.totalorder %s109, %s110
      %p124 = scmp.eq.s32.totalorder %s18, 1
      %p125 = por %p123, %p124
      %p127 = scmp.ne.s32.totalorder %s110, %s126
      %p128 = scmp.eq.s32.totalorder %s18, 0
      %p129 = por %p127, %p128
      %p130 = scmp.le.s32.totalorder 1, %s12
      %p131 = scmp.lt.s32.totalorder %s12, 3
      %p132 = pnand %p130, %p131
      %p133 = pneg %p132
      // Predicated region
      $region9: #{tpu_custom_call.1} parent=5 // pred_check
        _
      $region10: #{tpu_custom_call.1} parent=5 // pred_check_branch
        %135 = sbr.rel (%p132) target = $region12
      $region11: #{tpu_custom_call.1} parent=5 // pred_region
        %s136 = ssub.s32 %s12, 1
        // Predicated region
        $region13: #{tpu_custom_call.1} parent=11 // pred_check
          %p137 = pneg %p73
        $region14: #{tpu_custom_call.1} parent=11 // pred_check_branch
          %139 = sbr.rel (%p137) target = $region16
        $region15: #{tpu_custom_call.1} parent=11 // pred_region
          _
        $region16: #{tpu_custom_call.1} parent=11 // pred_fallthru
          _
        // Predicated region
        $region17: #{tpu_custom_call.1} parent=11 // pred_check
          %p140 = pneg %p94
        $region18: #{tpu_custom_call.1} parent=11 // pred_check_branch
          %142 = sbr.rel (%p140) target = $region20
        $region19: #{tpu_custom_call.1} parent=11 // pred_region
          _
        $region20: #{tpu_custom_call.1} parent=11 // pred_fallthru
          _
      $region12: #{tpu_custom_call.1} parent=5 // pred_fallthru
        _
      %p143 = scmp.lt.s32.totalorder %s12, 2
      // Predicated region
      $region21: #{tpu_custom_call.1} parent=5 // pred_check
        %p144 = pneg %p143
      $region22: #{tpu_custom_call.1} parent=5 // pred_check_branch
        %146 = sbr.rel (%p144) target = $region24
      $region23: #{tpu_custom_call.1} parent=5 // pred_region
        // Predicated region
        $region25: #{tpu_custom_call.1} parent=23 // pred_check
          %p147 = pneg %p46
        $region26: #{tpu_custom_call.1} parent=23 // pred_check_branch
          %149 = sbr.rel (%p147) target = $region28
        $region27: #{tpu_custom_call.1} parent=23 // pred_region
          %s150 = smul.u32 2, %s20
          %p151 = scmp.lt.s32.totalorder %s19, 1
          %s152 = scalar_select %p151, %s19, 1
          %p153 = scmp.lt.s32.totalorder %s150, 1
          %s154 = scalar_select %p153, %s150, 1
          %s155 = smul.addr %s152, 8
          %s156 = sadd.s32 %s154, %s155
          %s157 = smul.addr %s156, 8
          %s158 = scalar_lea.vmem %s0, %s157
          %s159 = smul.u32 2, %s20
        $region28: #{tpu_custom_call.1} parent=23 // pred_fallthru
          _
      $region24: #{tpu_custom_call.1} parent=5 // pred_fallthru
        _
      %p160 = scmp.le.s32.totalorder 1, %s12
      %p161 = scmp.lt.s32.totalorder %s12, 3
      %p162 = pnand %p160, %p161
      %p163 = pneg %p162
      // Predicated region
      $region29: #{tpu_custom_call.1} parent=5 // pred_check
        _
      $region30: #{tpu_custom_call.1} parent=5 // pred_check_branch
        %165 = sbr.rel (%p162) target = $region32
      $region31: #{tpu_custom_call.1} parent=5 // pred_region
        %s166 = ssub.s32 %s12, 1
        %s167 = smul.u32 2, %s22
        %p168 = scmp.lt.s32.totalorder %s21, 1
        %s169 = scalar_select %p168, %s21, 1
        %p170 = scmp.lt.s32.totalorder %s167, 1
        %s171 = scalar_select %p170, %s167, 1
        %s172 = smul.addr %s169, 8
        %s173 = sadd.s32 %s171, %s172
        %s174 = smul.addr %s173, 8
        %s175 = scalar_lea.vmem %s0, %s174
        %p176 = pneg %p52
        %p177 = pneg %p49
        %p178 = pneg %p73
        %p179 = pneg %p70
        %p180 = pneg %p94
        %p181 = pneg %p91
        %p182 = pneg %p122
        %p183 = pneg %p119
        %s184 = sand.u32 %s109, 1
        %s185 = scalar_lea.sflag [#allocation3], %s184
        %s186 = sand.u32 %s109, 1
        %s187 = smul.addr %s186, 32
        %s188 = scalar_lea.vmem [#allocation2], %s187
        %s189 = smul.u32 2, %s22
        %p190 = scmp.lt.s32.totalorder %s21, 1
        %s191 = scalar_select %p190, %s21, 1
        %p192 = scmp.lt.s32.totalorder %s189, 1
        %s193 = scalar_select %p192, %s189, 1
        %s194 = smul.addr %s191, 8
        %s195 = sadd.s32 %s193, %s194
        %s196 = smul.addr %s195, 8
        %s197 = scalar_lea.vmem %s0, %s196
        %s198 = smul.u32 2, %s22
        %s199 = smul.u32 2, %s22
        %v200 = vld [vmem:[%s1] sm:$0xff]
        %v201 = vld [vmem:[%s1 + $0x8] sm:$0xff]
        %v202 = vld [vmem:[%s197] sm:$0xff]
        %v203 = vld [vmem:[%s197 + $0x8] sm:$0xff]
        %v204 = vld [vmem:[%s197 + $0x10] sm:$0xff]
        %v205 = vld [vmem:[%s197 + $0x18] sm:$0xff]
        %v206 = vld [vmem:[%s197 + $0x20] sm:$0xff]
        %v207 = vld [vmem:[%s197 + $0x28] sm:$0xff]
        %v208 = vld [vmem:[%s197 + $0x30] sm:$0x7]
        %v209 = vld [vmem:[%s197 + $0x38] sm:$0x7]
        %v210 = vld [vmem:[%s2] sm:$0xff]
        %v211 = vld [vmem:[%s2 + $0x8] sm:$0xff]
        %213 = vset.pattern.permute.xlu0 0
        %214 = vperm.xlu0 %213, %v210
        %v215 = vpop.permute.xlu0 %214
        %218 = vset.pattern.permute.xlu0 0
        %219 = vperm.xlu0 %218, %v211
        %v220 = vpop.permute.xlu0 %219
        %vm222 = vcmask 220160
        %v224 = vsel %vm222, %v200, 0
        %v227 = vsel %vm222, %v201, 0
        %vm229 = vcmask 1042432
        %v231 = vsel %vm229, %v208, 0
        %v234 = vsel %vm229, %v209, 0
        %236 = vmatprep.subr.mxu0 %v203
        %237 = vmatpush1.msra.mxu0 %v202
        %238 = vmatprep.subr.mxu0 %v205
        %239 = vmatpush1.msra.mxu0 %v204
        %240 = vmatprep.subr.mxu0 %v207
        %241 = vmatpush1.msra.mxu0 %v206
        %242 = vmatprep.subr.mxu0 %v234
        %243 = vmatpush1.msra.mxu0 %v231
        %244 = vmatprep.subr.mxu0 0.0
        %245 = vmatpush1.msra.mxu0 0.0
        %246 = vmatprep.subr.mxu0 0.0
        %247 = vmatpush1.msra.mxu0 0.0
        %248 = vmatprep.subr.mxu0 0.0
        %249 = vmatpush1.msra.mxu0 0.0
        %250 = vmatprep.subr.mxu0 0.0
        %251 = vmatpush1.msra.mxu0 0.0
        %252 = vmatprep.subr.mxu0 0.0
        %253 = vmatpush1.msra.mxu0 0.0
        %254 = vmatprep.subr.mxu0 0.0
        %255 = vmatpush1.msra.mxu0 0.0
        %256 = vmatprep.subr.mxu0 0.0
        %257 = vmatpush1.msra.mxu0 0.0
        %258 = vmatprep.subr.mxu0 0.0
        %259 = vmatpush1.msra.mxu0 0.0
        %260 = vmatprep.subr.mxu0 0.0
        %261 = vmatpush1.msra.mxu0 0.0
        %262 = vmatprep.subr.mxu0 0.0
        %263 = vmatpush1.msra.mxu0 0.0
        %264 = vmatprep.subr.mxu0 0.0
        %265 = vmatpush1.msra.mxu0 0.0
        %266 = vmatprep.subr.mxu0 0.0
        %267 = vmatpush1.msra.mxu0 0.0
        %268 = vmatprep.subr.mxu0 0.0
        %269 = vmatpush1.msra.mxu0 0.0
        %270 = vmatprep.subr.mxu0 0.0
        %271 = vmatpush1.msra.mxu0 0.0
        %272 = vmatprep.subr.mxu0 0.0
        %273 = vmatpush1.msra.mxu0 0.0
        %274 = vmatprep.subr.mxu0 0.0
        %275 = vmatpush1.msra.mxu0 0.0
        %276 = vmatprep.subr.mxu0 0.0
        %277 = vmatpush1.msra.mxu0 0.0
        %278 = vmatprep.subr.mxu0 0.0
        %279 = vmatpush1.msra.mxu0 0.0
        %280 = vmatprep.subr.mxu0 0.0
        %281 = vmatpush1.msra.mxu0 0.0
        %282 = vmatprep.subr.mxu0 0.0
        %283 = vmatpush1.msra.mxu0 0.0
        %284 = vmatprep.subr.mxu0 0.0
        %285 = vmatpush1.msra.mxu0 0.0
        %286 = vmatprep.subr.mxu0 0.0
        %287 = vmatpush1.msra.mxu0 0.0
        %288 = vmatprep.subr.mxu0 0.0
        %289 = vmatpush1.msra.mxu0 0.0
        %290 = vmatprep.subr.mxu0 0.0
        %291 = vmatpush1.msra.mxu0 0.0
        %292 = vmatprep.subr.mxu0 0.0
        %293 = vmatpush1.msra.mxu0 0.0
        %294 = vmatprep.subr.mxu0 0.0
        %295 = vmatpush1.msra.mxu0 0.0
        %296 = vmatprep.subr.mxu0 0.0
        %297 = vmatpush1.msra.mxu0 0.0
        %298 = vmatprep.subr.mxu0 0.0
        %299 = vmatpush1.msra.mxu0 0.0
        %300 = vmatprep.mubr.f32.mxu0 0.0
        %301 = vmatmul.mubr.f32.gmra.mrb[0].mxu0 %v224
        %v302 = vpop.f32.mrb[0].mxu0
        %v303 = vadd.f32 %v215, %v302
        %v304 = vpop.f32.mrb[0].mxu0
        %v305 = vadd.f32 %v215, %v304
        %306 = vmatprep.mubr.f32.mxu0 0.0
        %307 = vmatmul.mubr.f32.gmra.mrb[0].mxu0 %v227
        %v308 = vpop.f32.mrb[0].mxu0
        %v309 = vadd.f32 %v220, %v308
        %v310 = vpop.f32.mrb[0].mxu0
        %v311 = vadd.f32 %v220, %v310
        %312 = vdwg.mxu0
        %v313 = vmax.f32 %v303, 0.0
        %v314 = vmax.f32 %v305, 0.0
        %v315 = vmax.f32 %v309, 0.0
        %v316 = vmax.f32 %v311, 0.0
        %317 = vst [vmem:[%s188] sm:$0xff] %v313
        %318 = vst [vmem:[%s188 + $0x8] sm:$0xff] %v314
        %319 = vst [vmem:[%s188 + $0x10] sm:$0xff] %v315
        %320 = vst [vmem:[%s188 + $0x18] sm:$0xff] %v316
        %s321 = sand.u32 %s109, 1
        %s322 = scalar_lea.sflag [#allocation3], %s321
        %s323 = sand.u32 %s109, 1
        %s324 = smul.addr %s323, 32
        %s325 = scalar_lea.vmem [#allocation2], %s324
        // Predicated region
        $region33: #{tpu_custom_call.1} parent=31 // pred_check
          %p326 = pneg %p119
        $region34: #{tpu_custom_call.1} parent=31 // pred_check_branch
          %328 = sbr.rel (%p326) target = $region36
        $region35: #{tpu_custom_call.1} parent=31 // pred_region
          %s329 = smul.u32 2, %s22
          %s331 = ssub.s32 512, 512
          %332 = vsyncadd %s322, %s331
          %s333 = smul.addr %s21, 4
          %s334 = sadd.s32 %s329, %s333
          %s335 = smul.addr %s334, 128
          %s336 = scalar_lea.hbm %s3, %s335
          %s337 = sshll.u32 %s325, 4
          %s338 = int_to_ptr.vmem [resolvable:$true] %s337
          %343 = dma.vmem_to_hbm [thread:$0]  %s338, 512, %s336, %s322, 256, 256, 16
        $region36: #{tpu_custom_call.1} parent=31 // pred_fallthru
          _
      $region32: #{tpu_custom_call.1} parent=5 // pred_fallthru
        _
      %p344 = scmp.le.s32.totalorder 2, %s12
      // Predicated region
      $region37: #{tpu_custom_call.1} parent=5 // pred_check
        %p345 = pneg %p344
      $region38: #{tpu_custom_call.1} parent=5 // pred_check_branch
        %347 = sbr.rel (%p345) target = $region40
      $region39: #{tpu_custom_call.1} parent=5 // pred_region
        %s348 = ssub.s32 %s12, 2
        // Predicated region
        $region41: #{tpu_custom_call.1} parent=39 // pred_check
          %p349 = pneg %p125
        $region42: #{tpu_custom_call.1} parent=39 // pred_check_branch
          %351 = sbr.rel (%p349) target = $region44
        $region43: #{tpu_custom_call.1} parent=39 // pred_region
          %s352 = sand.u32 %s110, 1
          %s353 = scalar_lea.sflag [#allocation3], %s352
          %s354 = sand.u32 %s110, 1
          %s355 = smul.addr %s354, 32
          %s356 = scalar_lea.vmem [#allocation2], %s355
          %357 = dma.done %s353, 512
        $region44: #{tpu_custom_call.1} parent=39 // pred_fallthru
          _
      $region40: #{tpu_custom_call.1} parent=5 // pred_fallthru
        _
    $region6: #{tpu_custom_call.1} parent=1 // loop_footer
      %s16 = sadd.s32 1, %s12
    $region7: #{tpu_custom_call.1} parent=1 // loop_footer_branch
      %11 = sbr.rel target = $region3
    $region8: #{tpu_custom_call.1} parent=1 // loop_exit
      _
    %358 = vsyncpa [#allocation3], 1
    %s359 = scalar_lea.sflag [#allocation3], 1
    %360 = vsyncpa %s359, 1

</llo_original>
